<compile_context>
chip_gen: v7x
topology: tpu7x:2x2x1
jax: 0.10.0
libtpu: 0.0.40
codegen_flags: <defaults>
</compile_context>

<pallas_src>
from typing import Any, Callable, Optional

import jax
import jax.numpy as jnp
from jax.experimental import pallas as pl
from jax.experimental.pallas import tpu as pltpu

_LANES = 128
_ACC_ROWS = 8             # per-core accumulator block: (8, 128) f32 = 4 KiB


def _cdiv(a: int, b: int) -> int:
    return -(-a // b)


def _device_kind() -> str:
    try:
        return jax.devices()[0].device_kind.lower()
    except Exception:
        return ""


def _sublane_align(dtype) -> int:
    """Native minimum sublane count for a dtype (8 for 4B, 16 for 2B, 32 for 1B)."""
    itemsize = jnp.dtype(dtype).itemsize
    return max(8, 32 // max(1, itemsize))


def _make_sq_err_kernel(rows: int, tile_rows: int, steps_per_core: int,
                        num_cores: int):
    """Kernel folding (x - y)^2 into a per-core (_ACC_ROWS, 128) f32 accumulator."""
    covered = num_cores * steps_per_core * tile_rows
    ragged = covered != rows          # any step can extend past the logical end
    chunks = tile_rows // _ACC_ROWS

    def kernel(x_ref, y_ref, o_ref):
        @pl.when(pl.program_id(1) == 0)
        def _init():
            o_ref[...] = jnp.zeros_like(o_ref)

        # Upcast in-kernel (keeps HBM traffic at the native input width).
        x = x_ref[...].astype(jnp.float32)
        y = y_ref[...].astype(jnp.float32)
        d = x - y
        sq = d * d

        def accumulate(vals):
            # Fold the tile into 8 sublanes: pure vreg adds, tiny accumulator.
            o_ref[...] += jnp.sum(
                vals.reshape(chunks, _ACC_ROWS, _LANES), axis=0)

        if ragged:
            g_step = pl.program_id(0) * steps_per_core + pl.program_id(1)
            block_start = g_step * tile_rows
            needs_mask = block_start + tile_rows > rows

            @pl.when(needs_mask)
            def _boundary():
                # Zero rows past the logical end (partial boundary block and any
                # clamped out-of-range step on the 2-core split).
                row = jax.lax.broadcasted_iota(
                    jnp.int32, (tile_rows, _LANES), 0)
                accumulate(jnp.where(block_start + row < rows, sq, 0.0))

            @pl.when(jnp.logical_not(needs_mask))
            def _steady():
                accumulate(sq)
        else:
            accumulate(sq)

    return kernel


def _pallas_sq_err_sum(x2d: jax.Array, y2d: jax.Array,
                       _tile_rows_cap: Optional[int] = None) -> jax.Array:
    """Sum of (x - y)^2 over a lane-dense (rows, 128) slab, reduced on-chip."""
    rows, lanes = x2d.shape
    assert lanes == _LANES
    assert x2d.dtype == y2d.dtype

    kind = _device_kind()
    is_v7x = "v7" in kind
    num_cores = 2 if is_v7x else 1               # real 2-TC sharding only on v7x
    tile_bytes = (4 << 20) if is_v7x else (2 << 20)

    align = _sublane_align(x2d.dtype)
    itemsize = jnp.dtype(x2d.dtype).itemsize
    max_tile_rows = max(align, (tile_bytes // (_LANES * itemsize)) // align * align)
    if _tile_rows_cap is not None:               # test hook: force multiple steps
        max_tile_rows = min(max_tile_rows, max(align, (_tile_rows_cap // align) * align))
    tile_rows = min(max_tile_rows, rows)         # rows is already align-multiple

    total_steps = _cdiv(rows, tile_rows)
    steps_per_core = _cdiv(total_steps, num_cores)
    last_block = total_steps - 1

    def in_map(c, i):
        # Clamp so the DMA never starts past the last (possibly partial) block;
        # clamped out-of-range steps are fully masked inside the kernel.
        return (jnp.minimum(c * steps_per_core + i, last_block), 0)

    if num_cores > 1:
        dims = (getattr(pltpu, "CORE_PARALLEL", "parallel"),
                getattr(pltpu, "ARBITRARY", "arbitrary"))
    else:
        dims = ("arbitrary", "arbitrary")

    out_rows = num_cores * _ACC_ROWS
    cost = pl.CostEstimate(
        flops=3 * rows * _LANES,
        transcendentals=0,
        bytes_accessed=2 * rows * _LANES * itemsize + out_rows * _LANES * 4,
    )

    partials = pl.pallas_call(
        _make_sq_err_kernel(rows, tile_rows, steps_per_core, num_cores),
        out_shape=jax.ShapeDtypeStruct((out_rows, _LANES), jnp.float32),
        grid_spec=pltpu.PrefetchScalarGridSpec(
            num_scalar_prefetch=0,
            grid=(num_cores, steps_per_core),
            in_specs=[
                pl.BlockSpec((tile_rows, _LANES), in_map),
                pl.BlockSpec((tile_rows, _LANES), in_map),
            ],
            # One tiny output block per core, constant over the reduction axis
            # (output-resident accumulator).
            out_specs=pl.BlockSpec((_ACC_ROWS, _LANES), lambda c, i: (c, 0)),
        ),
        compiler_params=pltpu.CompilerParams(
            dimension_semantics=dims,
            vmem_limit_bytes=32 * 1024 * 1024,
        ),
        cost_estimate=cost,
    )(x2d, y2d)

    # Final reduce of a 4-8 KiB slab — negligible.
    return jnp.sum(partials, dtype=jnp.float32)


def mse_metric_fn(input: jax.Array, target: jax.Array,
                  _tile_rows_cap: Optional[int] = None) -> jax.Array:
    """MSE metric; the streaming reduction hot path runs in the Pallas kernel."""
    x = jnp.asarray(input)
    y = jnp.asarray(target)
    assert x.shape == y.shape, (x.shape, y.shape)
    if x.dtype != y.dtype or not jnp.issubdtype(x.dtype, jnp.floating):
        x = x.astype(jnp.float32)
        y = y.astype(jnp.float32)

    n = x.size
    xf = x.reshape(-1)
    yf = y.reshape(-1)

    align = _sublane_align(x.dtype)
    chunk = _LANES * align
    rows_main = (n // chunk) * align
    n_main = rows_main * _LANES

    if rows_main == 0:
        # Tiny input: a kernel launch isn't worth it.
        d = xf.astype(jnp.float32) - yf.astype(jnp.float32)
        return jnp.sum(d * d) / jnp.float32(n)

    if n_main == n:
        # Common case: pure reshapes, zero copies, no padding.
        x2d = xf.reshape(rows_main, _LANES)
        y2d = yf.reshape(rows_main, _LANES)
        tail = jnp.float32(0.0)
    else:
        # TODO(synk): the ragged tail (< 128*align elements) still forces a slice of
        # the main slab (one copy); real metric tensors are practically always aligned.
        x2d = xf[:n_main].reshape(rows_main, _LANES)
        y2d = yf[:n_main].reshape(rows_main, _LANES)
        tx = xf[n_main:].astype(jnp.float32)
        ty = yf[n_main:].astype(jnp.float32)
        dt = tx - ty
        tail = jnp.sum(dt * dt)

    total = _pallas_sq_err_sum(x2d, y2d, _tile_rows_cap=_tile_rows_cap) + tail
    return total / jnp.float32(n)


# ----------------------------------------------------------------------------
# JAX mirror of torchmanager.metrics.metric.Metric / _WrappedMetric / metric_fn
# ----------------------------------------------------------------------------
class Metric:
    """Basic metric class mirroring the PyTorch `Metric` semantics."""

    def __init__(
        self,
        metric_fn: Optional[Callable[[Any, Any], jax.Array]] = None,
        target: Optional[str] = None,
    ) -> None:
        self._metric_fn = metric_fn
        self._results: list[jax.Array] = []
        self._target = target

    @property
    def result(self) -> jax.Array:
        if len(self._results) > 0:
            return jnp.concatenate(self._results).mean()
        else:
            return jnp.asarray(jnp.nan, jnp.float32)

    @property
    def results(self) -> Optional[jax.Array]:
        if len(self._results) > 0:
            return jnp.concatenate(self._results)
        else:
            return None

    def __call__(self, input: Any, target: Any) -> jax.Array:
        if self._target is not None:
            assert isinstance(input, dict) and isinstance(target, dict), (
                f"Given input or target must be dictionaries, got "
                f"{type(input)} and {type(target)}."
            )
            assert self._target in input and self._target in target, (
                f"Target '{self._target}' cannot be found in input or target"
            )
            input, target = input[self._target], target[self._target]
        m = self.forward(input, target)
        # torch: m.unsqueeze(0).cpu().detach()  -> store a length-1 array
        self._results.append(jnp.reshape(jax.lax.stop_gradient(m), (1,)))
        return m

    def forward(self, input: Any, target: Any) -> jax.Array:
        if self._metric_fn is not None:
            return self._metric_fn(input, target)
        else:
            raise NotImplementedError("metric_fn is not given.")

    def reset(self) -> None:
        self._results.clear()


class _WrappedMetric(Metric):
    @property
    def wrapped_metric_fn(self) -> Callable[[Any, Any], jax.Array]:
        assert self._metric_fn is not None, AttributeError(
            "Metric function is not given."
        )
        return self._metric_fn

    def __init__(
        self,
        metric_fn: Callable[[Any, Any], jax.Array],
        target: Optional[str] = None,
    ) -> None:
        super().__init__(metric_fn, target)

    def forward(self, input: Any, target: Any) -> jax.Array:
        # @torch.no_grad() equivalent
        return jax.lax.stop_gradient(self.wrapped_metric_fn(input, target))


def metric_fn(
    target: Optional[str] = None,
) -> Callable[[Callable[[Any, Any], jax.Array]], _WrappedMetric]:
    """Decorator that wraps a raw metric function into a `_WrappedMetric`."""

    def wrapped_fn(fn_to_wrap: Callable[[Any, Any], jax.Array]) -> _WrappedMetric:
        return _WrappedMetric(fn_to_wrap, target=target)

    return wrapped_fn


if __name__ == "__main__":
    key = jax.random.PRNGKey(0)
    k1, k2 = jax.random.split(key)

    # NCHW-shaped prediction / label pair (small shapes).
    B, C, H, W = 2, 4, 16, 16
    y_pred = jax.random.normal(k1, (B, C, H, W), jnp.float32)
    y_true = jax.random.normal(k2, (B, C, H, W), jnp.float32)

    # Build the metric via the decorator, with target-key dispatch ('out').
    @metric_fn(target="out")
    def some_metric_fn(inp, tgt):
        return mse_metric_fn(inp, tgt)

    m = some_metric_fn({"out": y_pred}, {"out": y_true})
    m = jax.block_until_ready(m)

    # Reference check against plain JAX MSE.
    ref = jnp.mean((y_pred - y_true) ** 2)
    assert jnp.allclose(m, ref, rtol=1e-5, atol=1e-5), (m, ref)

    # bf16 inputs with a non-aligned element count (exercises in-kernel upcast,
    # 16-sublane bf16 tiles, and the jnp tail path with no padding).
    y_pred_b = jax.random.normal(k1, (3, 5, 16, 16), jnp.bfloat16)
    y_true_b = jax.random.normal(k2, (3, 5, 16, 16), jnp.bfloat16)
    m2 = jax.block_until_ready(mse_metric_fn(y_pred_b, y_true_b))
    ref2 = jnp.mean(
        (y_pred_b.astype(jnp.float32) - y_true_b.astype(jnp.float32)) ** 2)
    assert jnp.allclose(m2, ref2, rtol=1e-4, atol=1e-4), (m2, ref2)

    # Force multiple grid steps with a ragged boundary block (exercises the
    # pl.when-gated mask path): 3072 elems = 24 rows, 16-row tiles -> 2 steps.
    y_pred_c = jax.random.normal(k1, (3, 4, 16, 16), jnp.float32)
    y_true_c = jax.random.normal(k2, (3, 4, 16, 16), jnp.float32)
    m3 = jax.block_until_ready(
        mse_metric_fn(y_pred_c, y_true_c, _tile_rows_cap=16))
    ref3 = jnp.mean((y_pred_c - y_true_c) ** 2)
    assert jnp.allclose(m3, ref3, rtol=1e-5, atol=1e-5), (m3, ref3)

    # Tiny input (below one aligned chunk) uses the pure-jnp fallback.
    y_pred_t = jax.random.normal(k1, (3, 7, 5), jnp.float32)
    y_true_t = jax.random.normal(k2, (3, 7, 5), jnp.float32)
    m4 = jax.block_until_ready(mse_metric_fn(y_pred_t, y_true_t))
    ref4 = jnp.mean((y_pred_t - y_true_t) ** 2)
    assert jnp.allclose(m4, ref4, rtol=1e-5, atol=1e-5), (m4, ref4)

    # Exercise the results accumulation / result mean path too.
    _ = some_metric_fn({"out": y_true}, {"out": y_true})  # exact zero metric
    avg = jax.block_until_ready(some_metric_fn.result)
    assert jnp.allclose(avg, (m + 0.0) / 2.0, rtol=1e-5, atol=1e-5)

    print("KERNEL_OK")
</pallas_src>

<mosaic_0001>
module attributes {stable_mosaic.version = 11 : i64} {
  func.func @kernel(%arg0: i32, %arg1: i32, %arg2: memref<16x128xf32, #tpu.memory_space<vmem>>, %arg3: memref<16x128xf32, #tpu.memory_space<vmem>>, %arg4: memref<8x128xf32, #tpu.memory_space<vmem>>) attributes {dimension_semantics = [#tpu.dimension_semantics<arbitrary>, #tpu.dimension_semantics<arbitrary>], iteration_bounds = array<i64: 1, 1>, scalar_prefetch = 0 : i64, scratch_operands = 0 : i64, tpu.core_type = #tpu.core_type<tc>, window_params = [{transform_indices = @transform_0, window_bounds = array<i64: 16, 128>}, {transform_indices = @transform_1, window_bounds = array<i64: 16, 128>}, {transform_indices = @transform_2, window_bounds = array<i64: 8, 128>}]} {
    %c0_i32 = arith.constant 0 : i32
    %0 = arith.cmpi eq, %arg1, %c0_i32 : i32
    %1 = arith.extui %0 : i1 to i32
    %c0_i32_0 = arith.constant 0 : i32
    %2 = arith.cmpi ne, %1, %c0_i32_0 : i32
    scf.if %2 {
      %cst_8 = arith.constant 0.000000e+00 : f32
      %12 = vector.broadcast %cst_8 : f32 to vector<8x128xf32>
      %c0_9 = arith.constant 0 : index
      %c0_10 = arith.constant 0 : index
      %13 = vector.load %arg4[%c0_9, %c0_10] : memref<8x128xf32, #tpu.memory_space<vmem>>, vector<8x128xf32>
      tpu.vector_store %arg4[%c0_9, %c0_10], %12 {strides = array<i32>} : memref<8x128xf32, #tpu.memory_space<vmem>>, vector<8x128xf32>,
    } else {
    }
    %c0 = arith.constant 0 : index
    %c0_1 = arith.constant 0 : index
    %3 = vector.load %arg2[%c0, %c0_1] : memref<16x128xf32, #tpu.memory_space<vmem>>, vector<16x128xf32>
    %c0_2 = arith.constant 0 : index
    %c0_3 = arith.constant 0 : index
    %4 = vector.load %arg3[%c0_2, %c0_3] : memref<16x128xf32, #tpu.memory_space<vmem>>, vector<16x128xf32>
    %5 = arith.subf %3, %4 : vector<16x128xf32>
    %6 = arith.mulf %5, %5 : vector<16x128xf32>
    %c0_4 = arith.constant 0 : index
    %c0_5 = arith.constant 0 : index
    %7 = vector.load %arg4[%c0_4, %c0_5] : memref<8x128xf32, #tpu.memory_space<vmem>>, vector<8x128xf32>
    %8 = vector.shape_cast %6 : vector<16x128xf32> to vector<2x8x128xf32>
    %cst = arith.constant dense<0.000000e+00> : vector<8x128xf32>
    %9 = vector.multi_reduction <add>, %8, %cst [0] : vector<2x8x128xf32> to vector<8x128xf32>
    %10 = arith.addf %7, %9 : vector<8x128xf32>
    %c0_6 = arith.constant 0 : index
    %c0_7 = arith.constant 0 : index
    %11 = vector.load %arg4[%c0_6, %c0_7] : memref<8x128xf32, #tpu.memory_space<vmem>>, vector<8x128xf32>
    tpu.vector_store %arg4[%c0_6, %c0_7], %10 {strides = array<i32>} : memref<8x128xf32, #tpu.memory_space<vmem>>, vector<8x128xf32>,
    return
  }
  func.func @transform_0(%arg0: i32, %arg1: i32) -> (i32, i32) {
    %c1_i32 = arith.constant 1 : i32
    %0 = arith.muli %arg0, %c1_i32 : i32
    %1 = arith.addi %0, %arg1 : i32
    %c0_i32 = arith.constant 0 : i32
    %2 = arith.minsi %1, %c0_i32 : i32
    %c0_i32_0 = arith.constant 0 : i32
    %c0_i32_1 = arith.constant 0 : i32
    return %2, %c0_i32_0 : i32, i32
  }
  func.func @transform_1(%arg0: i32, %arg1: i32) -> (i32, i32) {
    %c1_i32 = arith.constant 1 : i32
    %0 = arith.muli %arg0, %c1_i32 : i32
    %1 = arith.addi %0, %arg1 : i32
    %c0_i32 = arith.constant 0 : i32
    %2 = arith.minsi %1, %c0_i32 : i32
    %c0_i32_0 = arith.constant 0 : i32
    %c0_i32_1 = arith.constant 0 : i32
    return %2, %c0_i32_0 : i32, i32
  }
  func.func @transform_2(%arg0: i32, %arg1: i32) -> (i32, i32) {
    %c0_i32 = arith.constant 0 : i32
    %c0_i32_0 = arith.constant 0 : i32
    return %arg0, %c0_i32 : i32, i32
  }
}

</mosaic_0001>

<llo_original>
// kernel: tpu_custom_call.1
$region0: #{tpu_custom_call.1}
  #allocation0 [shape = 'u32[]', space=smem, size = 0x4, offset = 0x4, fixed_abs, tag = 'smem constant byte address 0x4 - core index']
  #allocation1 [shape = 'u32[144,128]{1,0:T(1,128)}', space=vmem, size = 0x12000, scoped, tag = 'internal scratch']
  %s0 = inlined_call_operand.hbm [shape: f32[16,128], index: 0, kind: input, shape index: {}]
  %s1 = inlined_call_operand.hbm [shape: f32[16,128], index: 1, kind: input, shape index: {}]
  %s2 = inlined_call_operand.hbm [shape: f32[8,128], index: 2, kind: output, shape index: {}]
  %s3 = sld [smem:[#allocation0]]
  $region30: #{tpu_custom_call.1} parent=0
    _
  %s5 = ssub.s32 1, %s3
  %s6 = scalar_select 0, %s5, %s3
  $region1: #{tpu_custom_call.1} parent=0
    #allocation2 [shape = 'u8[8192]{0}', space=vmem, size = 0x2000, scoped, tag = 'input window, operand 0, single buffered']
    #allocation3 [shape = 's32[1]{0}', space=sflag, size = 0x4, scoped, tag = 'scoped memory for tpu_custom_call.1']
    #allocation4 [shape = 's32[1]{0}', space=sflag, size = 0x4, scoped, tag = 'scoped memory for tpu_custom_call.1']
    #allocation5 [shape = 'u8[8192]{0}', space=vmem, size = 0x2000, scoped, tag = 'input window, operand 1, single buffered']
    #allocation6 [shape = 's32[1]{0}', space=sflag, size = 0x4, scoped, tag = 'scoped memory for tpu_custom_call.1']
    #allocation7 [shape = 'u8[4096]{0}', space=vmem, size = 0x1000, scoped, tag = 'output window, operand 0, single buffered']
    %7 = vsyncpa [#allocation3], 0
    %8 = vsyncpa [#allocation6], 0
    %9 = vsyncpa [#allocation4], 0
    // Predicated region
    $region2: #{tpu_custom_call.1} parent=1 // pred_check
      _
    $region3: #{tpu_custom_call.1} parent=1 // pred_check_branch
      %11 = sbr.rel (0) target = $region5
    $region4: #{tpu_custom_call.1} parent=1 // pred_region
      %s12 = sadd.s32 0, 0
      %p13 = scmp.lt.s32.totalorder %s12, 0
      %s14 = scalar_select %p13, %s12, 0
      %s15 = smul.u32 2, %s14
      %s17 = ssub.s32 256, 256
      %18 = vsyncadd [#allocation3], %s17
      %s19 = smul.addr %s15, 128
      %s20 = scalar_lea.hbm %s0, %s19
      %s21 = sshll.u32 [#allocation2], 4
      %s22 = int_to_ptr.vmem [resolvable:$true] %s21
      %27 = dma.hbm_to_vmem [thread:$0]  %s20, 256, %s22, [#allocation3], 128, 128, 8
    $region5: #{tpu_custom_call.1} parent=1 // pred_fallthru
      _
    // Predicated region
    $region6: #{tpu_custom_call.1} parent=1 // pred_check
      _
    $region7: #{tpu_custom_call.1} parent=1 // pred_check_branch
      %29 = sbr.rel (0) target = $region9
    $region8: #{tpu_custom_call.1} parent=1 // pred_region
      %s30 = sadd.s32 0, 0
      %p31 = scmp.lt.s32.totalorder %s30, 0
      %s32 = scalar_select %p31, %s30, 0
      %s33 = smul.u32 2, %s32
      %s35 = ssub.s32 256, 256
      %36 = vsyncadd [#allocation6], %s35
      %s37 = smul.addr %s33, 128
      %s38 = scalar_lea.hbm %s1, %s37
      %s39 = sshll.u32 [#allocation5], 4
      %s40 = int_to_ptr.vmem [resolvable:$true] %s39
      %45 = dma.hbm_to_vmem [thread:$0]  %s38, 256, %s40, [#allocation6], 128, 128, 8
    $region9: #{tpu_custom_call.1} parent=1 // pred_fallthru
      _
    // Predicated region
    $region10: #{tpu_custom_call.1} parent=1 // pred_check
      _
    $region11: #{tpu_custom_call.1} parent=1 // pred_check_branch
      %47 = sbr.rel (0) target = $region13
    $region12: #{tpu_custom_call.1} parent=1 // pred_region
      %48 = dma.done [#allocation3], 256
    $region13: #{tpu_custom_call.1} parent=1 // pred_fallthru
      _
    // Predicated region
    $region14: #{tpu_custom_call.1} parent=1 // pred_check
      _
    $region15: #{tpu_custom_call.1} parent=1 // pred_check_branch
      %50 = sbr.rel (0) target = $region17
    $region16: #{tpu_custom_call.1} parent=1 // pred_region
      %51 = dma.done [#allocation6], 256
    $region17: #{tpu_custom_call.1} parent=1 // pred_fallthru
      _
    %s52 = sadd.s32 0, 0
    %p53 = scmp.lt.s32.totalorder %s52, 0
    %s54 = scalar_select %p53, %s52, 0
    %s55 = smul.u32 2, %s54
    %s56 = sadd.s32 0, 0
    %p57 = scmp.lt.s32.totalorder %s56, 0
    %s58 = scalar_select %p57, %s56, 0
    %s59 = smul.u32 2, %s58
    %p60 = scmp.eq.s32.totalorder 0, 0
    // Predicated region
    $region18: #{tpu_custom_call.1} parent=1 // pred_check
      %p61 = pneg %p60
    $region19: #{tpu_custom_call.1} parent=1 // pred_check_branch
      %63 = sbr.rel (%p61) target = $region21
    $region20: #{tpu_custom_call.1} parent=1 // pred_region
      %64 = vst [vmem:[#allocation7] sm:$0xff] 0.0
    $region21: #{tpu_custom_call.1} parent=1 // pred_fallthru
      _
    %v65 = vld [vmem:[#allocation2] sm:$0xff]
    %v66 = vld [vmem:[#allocation2 + $0x8] sm:$0xff]
    %v67 = vld [vmem:[#allocation5] sm:$0xff]
    %v68 = vld [vmem:[#allocation5 + $0x8] sm:$0xff]
    %v69 = vsub.f32 %v65, %v67
    %v70 = vsub.f32 %v66, %v68
    %v71 = vmul.f32 %v69, %v69
    %v72 = vmul.f32 %v70, %v70
    %v73 = vld [vmem:[#allocation7] sm:$0xff]
    %v74 = vadd.f32 %v71, %v72
    %v75 = vadd.f32 %v73, %v74
    %76 = vst [vmem:[#allocation7] sm:$0xff] %v75
    // Predicated region
    $region22: #{tpu_custom_call.1} parent=1 // pred_check
      _
    $region23: #{tpu_custom_call.1} parent=1 // pred_check_branch
      %78 = sbr.rel (0) target = $region25
    $region24: #{tpu_custom_call.1} parent=1 // pred_region
      %s80 = ssub.s32 128, 128
      %81 = vsyncadd [#allocation4], %s80
      %s83 = sshll.u32 [#allocation7], 4
      %s84 = int_to_ptr.vmem [resolvable:$true] %s83
      %86 = dma.vmem_to_hbm [thread:$0]  %s84, 128, %s2, [#allocation4]
    $region25: #{tpu_custom_call.1} parent=1 // pred_fallthru
      _
    // Predicated region
    $region26: #{tpu_custom_call.1} parent=1 // pred_check
      _
    $region27: #{tpu_custom_call.1} parent=1 // pred_check_branch
      %88 = sbr.rel (0) target = $region29
    $region28: #{tpu_custom_call.1} parent=1 // pred_region
      %89 = dma.done [#allocation4], 128
    $region29: #{tpu_custom_call.1} parent=1 // pred_fallthru
      _
    %90 = vsyncpa [#allocation3], 1
    %91 = vsyncpa [#allocation6], 1
    %92 = vsyncpa [#allocation4], 1

</llo_original>
